<compile_context>
chip_gen: v7x
topology: tpu7x:2x2x1
jax: 0.10.0
libtpu: 0.0.40
codegen_flags: <defaults>
</compile_context>

<pallas_src>
import functools

import jax
import jax.numpy as jnp
from jax.experimental import pallas as pl
from jax.experimental.pallas import tpu as pltpu

_K_IN = 400        # fixed by nn.Linear(400, num_classes)
_LANE = 128
_SUBLANE = 8
# Cap chosen against v7x (32 MiB scoped / 64 MiB physical VMEM):
#   2 x (2048*400*4 B)  = 6.25 MiB  double-buffered f32 x tiles
#   2 x (2048*128*2 B)  = 1.0  MiB  double-buffered bf16 out tiles
#   400*128*2 B + 128*4 ≈ 0.1  MiB  resident W + bias
_TILE_B_CAP = 2048


def _round_up(x, m):
    return (x + m - 1) // m * m


def _pick_tile_b(B):
    """Batch tile: multiple of 8 sublanes, >=2 grid steps when possible (v7x
    2-TC sharding), capped so tiles fit every generation's VMEM."""
    if B <= _SUBLANE:
        return _SUBLANE
    half = _round_up(pl.cdiv(B, 2), _SUBLANE)
    return min(_TILE_B_CAP, half)


def _linear_kernel(x_ref, w_ref, b_ref, o_ref):
    # x_ref: (TILE_B, 400) f32   w_ref: (400, C_pad) bf16
    # b_ref: (1, C_pad) f32      o_ref: (TILE_B, C_pad) bf16
    x_bf16 = x_ref[...].astype(jnp.bfloat16)          # cast in-kernel (VPU slot)
    acc = jnp.dot(x_bf16, w_ref[...], preferred_element_type=jnp.float32)
    # Bias add stays f32 (safe on v5e's non-bf16 VPU); cast only on the store.
    o_ref[...] = (acc + b_ref[...]).astype(o_ref.dtype)


def pack_fc1_params(w, b):
    """Pad fc1 params to a lane-dense class dim; call once and reuse.

    w: (400, C) f32 -> (400, C_pad=round_up(C,128)) bf16, zero-padded columns
    b: (C,)     f32 -> (1, C_pad) f32, zero-padded
    Zero padding guarantees padded class columns contribute nothing.
    """
    K, C = w.shape
    C_pad = _round_up(C, _LANE)
    w_p = jnp.zeros((K, C_pad), jnp.float32).at[:, :C].set(w)
    b_p = jnp.zeros((1, C_pad), jnp.float32).at[0, :C].set(b)
    return w_p.astype(jnp.bfloat16), b_p


@functools.partial(jax.jit, static_argnames=("num_classes", "force_pallas"))
def torch_cnn_forward(x, w_packed, b_packed, *, num_classes, force_pallas=False):
    """x: (B, 400) f32 `res` features -> (B, num_classes) f32 logits."""
    B, K = x.shape
    K_w, C_pad = w_packed.shape

    # Small-batch fast path: at a few rows the pallas_call fixed cost dwarfs
    # the GEMM.  (Better still: fuse into the backbone kernel, see TODO above.)
    if not force_pallas and B <= 64:
        out = jnp.dot(x.astype(jnp.bfloat16), w_packed,
                      preferred_element_type=jnp.float32) + b_packed
        return out[:, :num_classes]

    TILE_B = _pick_tile_b(B)
    grid = (pl.cdiv(B, TILE_B),)

    out = pl.pallas_call(
        _linear_kernel,
        out_shape=jax.ShapeDtypeStruct((B, C_pad), jnp.bfloat16),
        grid=grid,
        in_specs=[
            # x streamed, unpadded f32 (last block dim == full array dim 400).
            pl.BlockSpec((TILE_B, K), lambda i: (i, 0)),
            # Weights / bias resident across all grid steps.
            pl.BlockSpec((K_w, C_pad), lambda i: (0, 0)),
            pl.BlockSpec((1, C_pad), lambda i: (0, 0)),
        ],
        out_specs=pl.BlockSpec((TILE_B, C_pad), lambda i: (i, 0)),
        compiler_params=pltpu.CompilerParams(
            # Independent batch tiles -> shard across v7x's 2 TensorCores;
            # harmless no-op on single-TC v5e/v6e.
            dimension_semantics=("parallel",),
        ),
    )(x, w_packed, b_packed)

    # Slice padded class columns off; tiny cast back to f32 for API parity.
    return out[:, :num_classes].astype(jnp.float32)


if __name__ == "__main__":
    num_classes = 10
    in_features = _K_IN

    key = jax.random.PRNGKey(0)
    kx, kw, kb, kx2 = jax.random.split(key, 4)

    # Deterministic fc1 params, mimicking PyTorch Linear's U(-1/sqrt(K), 1/sqrt(K)).
    bound = 1.0 / (in_features ** 0.5)
    w = jax.random.uniform(kw, (in_features, num_classes), minval=-bound,
                           maxval=bound, dtype=jnp.float32)
    b = jax.random.uniform(kb, (num_classes,), minval=-bound, maxval=bound,
                           dtype=jnp.float32)
    w_packed, b_packed = pack_fc1_params(w, b)   # pack once, reuse

    # 1) Module-sized case: batch=2 features out of `res` (identity stand-in),
    #    forced through the Pallas kernel (partial tile: block rows > B).
    x_small = jax.random.normal(kx, (2, in_features), dtype=jnp.float32)
    out_small = torch_cnn_forward(x_small, w_packed, b_packed,
                                  num_classes=num_classes, force_pallas=True)
    jax.block_until_ready(out_small)
    ref_small = x_small @ w + b[None, :]
    assert out_small.shape == (2, num_classes)
    assert jnp.allclose(out_small, ref_small, atol=2e-2, rtol=2e-2), (
        float(jnp.max(jnp.abs(out_small - ref_small))))

    # 2) Ragged larger batch: 2 grid steps (one per v7x TC), last one partial,
    #    no batch padding / no wrapper pad+cast of x.
    x_big = jax.random.normal(kx2, (520, in_features), dtype=jnp.float32)
    out_big = torch_cnn_forward(x_big, w_packed, b_packed,
                                num_classes=num_classes, force_pallas=True)
    jax.block_until_ready(out_big)
    ref_big = x_big @ w + b[None, :]
    assert out_big.shape == (520, num_classes)
    assert jnp.allclose(out_big, ref_big, atol=2e-2, rtol=2e-2), (
        float(jnp.max(jnp.abs(out_big - ref_big))))

    # 3) Default dispatch at tiny batch takes the non-Pallas fast path.
    out_fast = torch_cnn_forward(x_small, w_packed, b_packed,
                                 num_classes=num_classes)
    jax.block_until_ready(out_fast)
    assert jnp.allclose(out_fast, ref_small, atol=2e-2, rtol=2e-2)

    print("KERNEL_OK")
</pallas_src>

<mosaic_0001>
module attributes {stable_mosaic.version = 11 : i64} {
  func.func @_linear_kernel(%arg0: i32, %arg1: memref<8x400xf32, #tpu.memory_space<vmem>>, %arg2: memref<400x128xbf16, #tpu.memory_space<vmem>>, %arg3: memref<1x128xf32, #tpu.memory_space<vmem>>, %arg4: memref<8x128xbf16, #tpu.memory_space<vmem>>) attributes {dimension_semantics = [#tpu.dimension_semantics<parallel>], iteration_bounds = array<i64: 1>, scalar_prefetch = 0 : i64, scratch_operands = 0 : i64, tpu.core_type = #tpu.core_type<tc>, window_params = [{transform_indices = @transform_0, window_bounds = array<i64: 8, 400>}, {pipeline_mode = #tpu.pipeline_mode<synchronous>, transform_indices = @transform_1, window_bounds = array<i64: 400, 128>}, {pipeline_mode = #tpu.pipeline_mode<synchronous>, transform_indices = @transform_2, window_bounds = array<i64: 1, 128>}, {transform_indices = @transform_3, window_bounds = array<i64: 8, 128>}]} {
    %c0 = arith.constant 0 : index
    %c0_0 = arith.constant 0 : index
    %0 = vector.load %arg1[%c0, %c0_0] : memref<8x400xf32, #tpu.memory_space<vmem>>, vector<8x400xf32>
    %1 = arith.truncf %0 : vector<8x400xf32> to vector<8x400xbf16>
    %c0_1 = arith.constant 0 : index
    %c0_2 = arith.constant 0 : index
    %2 = vector.load %arg2[%c0_1, %c0_2] : memref<400x128xbf16, #tpu.memory_space<vmem>>, vector<400x128xbf16>
    %cst = arith.constant dense<0.000000e+00> : vector<8x128xf32>
    %3 = tpu.matmul %1, %2, %cst {dimension_numbers = #tpu.dot_dimension_numbers<[1], [0], [0], [1], [0, 0, 1, 1], [], []>} : vector<8x400xbf16>, vector<400x128xbf16>, vector<8x128xf32> -> vector<8x128xf32>
    %c0_3 = arith.constant 0 : index
    %c0_4 = arith.constant 0 : index
    %4 = vector.load %arg3[%c0_3, %c0_4] : memref<1x128xf32, #tpu.memory_space<vmem>>, vector<1x128xf32>
    %5 = vector.broadcast %4 : vector<1x128xf32> to vector<8x128xf32>
    %6 = arith.addf %3, %5 : vector<8x128xf32>
    %7 = arith.truncf %6 : vector<8x128xf32> to vector<8x128xbf16>
    %c0_5 = arith.constant 0 : index
    %c0_6 = arith.constant 0 : index
    %8 = vector.load %arg4[%c0_5, %c0_6] : memref<8x128xbf16, #tpu.memory_space<vmem>>, vector<8x128xbf16>
    tpu.vector_store %arg4[%c0_5, %c0_6], %7 {strides = array<i32>} : memref<8x128xbf16, #tpu.memory_space<vmem>>, vector<8x128xbf16>,
    return
  }
  func.func @transform_0(%arg0: i32) -> (i32, i32) {
    %c0_i32 = arith.constant 0 : i32
    %c0_i32_0 = arith.constant 0 : i32
    return %arg0, %c0_i32 : i32, i32
  }
  func.func @transform_1(%arg0: i32) -> (i32, i32) {
    %c0_i32 = arith.constant 0 : i32
    %c0_i32_0 = arith.constant 0 : i32
    %c0_i32_1 = arith.constant 0 : i32
    return %c0_i32, %c0_i32_0 : i32, i32
  }
  func.func @transform_2(%arg0: i32) -> (i32, i32) {
    %c0_i32 = arith.constant 0 : i32
    %c0_i32_0 = arith.constant 0 : i32
    %c0_i32_1 = arith.constant 0 : i32
    return %c0_i32, %c0_i32_0 : i32, i32
  }
  func.func @transform_3(%arg0: i32) -> (i32, i32) {
    %c0_i32 = arith.constant 0 : i32
    %c0_i32_0 = arith.constant 0 : i32
    return %arg0, %c0_i32 : i32, i32
  }
}

</mosaic_0001>

<llo_original>
// kernel: torch_cnn_forward.1
$region0: #{torch_cnn_forward.1}
  #allocation0 [shape = 'u32[]', space=smem, size = 0x4, offset = 0x4, fixed_abs, tag = 'smem constant byte address 0x4 - core index']
  #allocation1 [shape = 'u32[144,128]{1,0:T(1,128)}', space=vmem, size = 0x12000, scoped, tag = 'internal scratch']
  %s0 = inlined_call_operand.hbm [shape: f32[2,400], index: 0, kind: input, shape index: {}]
  %s1 = inlined_call_operand.hbm [shape: bf16[400,128], index: 1, kind: input, shape index: {}]
  %s2 = inlined_call_operand.vmem [shape: f32[1,128], index: 2, kind: input, shape index: {}]
  %s3 = inlined_call_operand.vmem [shape: bf16[2,128], index: 3, kind: output, shape index: {}]
  %s4 = sld [smem:[#allocation0]]
  $region60: #{torch_cnn_forward.1} parent=0
    _
  %s6 = ssub.s32 1, %s4
  %s7 = scalar_select 0, %s6, %s4
  $region1: #{torch_cnn_forward.1} parent=0
    #allocation2 [shape = 'u8[16384]{0}', space=vmem, size = 0x4000, scoped, tag = 'input window, operand 0, single buffered']
    #allocation3 [shape = 's32[1]{0}', space=sflag, size = 0x4, scoped, tag = 'scoped memory for torch_cnn_forward.1']
    #allocation4 [shape = 'u8[102400]{0}', space=vmem, size = 0x19000, scoped, tag = 'input window, operand 1, single buffered']
    #allocation5 [shape = 's32[1]{0}', space=sflag, size = 0x4, scoped, tag = 'scoped memory for torch_cnn_forward.1']
    #allocation6 [shape = 'u8[2048]{0}', space=vmem, size = 0x800, scoped, tag = 'output window, operand 0, single buffered']
    %8 = vsyncpa [#allocation3], 0
    %9 = vsyncpa [#allocation5], 0
    // Predicated region
    $region2: #{torch_cnn_forward.1} parent=1 // pred_check
      _
    $region3: #{torch_cnn_forward.1} parent=1 // pred_check_branch
      %11 = sbr.rel (0) target = $region5
    $region4: #{torch_cnn_forward.1} parent=1 // pred_region
      %s13 = ssub.s32 512, 128
      %14 = vsyncadd [#allocation3], %s13
      %s15 = sshll.u32 [#allocation2], 4
      %s16 = int_to_ptr.vmem [resolvable:$true] %s15
      %21 = dma.hbm_to_vmem [thread:$0]  %s0, 128, %s16, [#allocation3], 128, 128, 8
    $region5: #{torch_cnn_forward.1} parent=1 // pred_fallthru
      _
    // Predicated region
    $region6: #{torch_cnn_forward.1} parent=1 // pred_check
      _
    $region7: #{torch_cnn_forward.1} parent=1 // pred_check_branch
      %23 = sbr.rel (0) target = $region9
    $region8: #{torch_cnn_forward.1} parent=1 // pred_region
      %s25 = ssub.s32 3200, 3200
      %26 = vsyncadd [#allocation5], %s25
      %s27 = sshll.u32 [#allocation4], 4
      %s28 = int_to_ptr.vmem [resolvable:$true] %s27
      %33 = dma.hbm_to_vmem [thread:$0]  %s1, 3200, %s28, [#allocation5], 64, 64, 4
    $region9: #{torch_cnn_forward.1} parent=1 // pred_fallthru
      _
    // Predicated region
    $region10: #{torch_cnn_forward.1} parent=1 // pred_check
      _
    $region11: #{torch_cnn_forward.1} parent=1 // pred_check_branch
      %35 = sbr.rel (0) target = $region13
    $region12: #{torch_cnn_forward.1} parent=1 // pred_region
      _
    $region13: #{torch_cnn_forward.1} parent=1 // pred_fallthru
      _
    // Predicated region
    $region14: #{torch_cnn_forward.1} parent=1 // pred_check
      _
    $region15: #{torch_cnn_forward.1} parent=1 // pred_check_branch
      %37 = sbr.rel (0) target = $region17
    $region16: #{torch_cnn_forward.1} parent=1 // pred_region
      %38 = dma.done [#allocation3], 512
    $region17: #{torch_cnn_forward.1} parent=1 // pred_fallthru
      _
    // Predicated region
    $region18: #{torch_cnn_forward.1} parent=1 // pred_check
      _
    $region19: #{torch_cnn_forward.1} parent=1 // pred_check_branch
      %40 = sbr.rel (0) target = $region21
    $region20: #{torch_cnn_forward.1} parent=1 // pred_region
      %41 = dma.done [#allocation5], 3200
    $region21: #{torch_cnn_forward.1} parent=1 // pred_fallthru
      _
    %v43 = vld [vmem:[#allocation2] sm:$0xff]
    %v44 = vld [vmem:[#allocation2 + $0x8] sm:$0xff]
    %v45 = vld [vmem:[#allocation2 + $0x10] sm:$0xff]
    %v46 = vld [vmem:[#allocation2 + $0x18] sm:$0xff]
    %v51 = vcombine.low %v43, %v44
    %v52 = vcombine.high %v43, %v44
    %v53 = vcombine.low %v45, %v46
    %v54 = vcombine.high %v45, %v46
    %v56 = vunpack.c.l.s4 1983009808
    %v57 = vunpack.c.0.s8 %v56
    %v58 = vlaneseq
    %v59 = vshrl.u32 %v58, 7
    %v60 = vsub.s32 %v57, %v59
    %v61 = vrot.slane %v51, %v60
    %v63 = vunpack.c.l.s4 1983009808
    %v64 = vunpack.c.0.s8 %v63
    %v65 = vlaneseq
    %v66 = vshrl.u32 %v65, 7
    %v67 = vsub.s32 %v64, %v66
    %v68 = vrot.slane %v52, %v67
    %v70 = vunpack.c.l.s4 1983009808
    %v71 = vunpack.c.0.s8 %v70
    %v72 = vlaneseq
    %v73 = vshrl.u32 %v72, 7
    %v74 = vsub.s32 %v71, %v73
    %v75 = vrot.slane %v53, %v74
    %v77 = vunpack.c.l.s4 1983009808
    %v78 = vunpack.c.0.s8 %v77
    %v79 = vlaneseq
    %v80 = vshrl.u32 %v79, 7
    %v81 = vsub.s32 %v78, %v80
    %v82 = vrot.slane %v54, %v81
    %v83 = vcombine.low %v61, %v75
    %v84 = vcombine.high %v61, %v75
    %v85 = vcombine.low %v68, %v82
    %v86 = vcombine.high %v68, %v82
    %v91 = vpack.c.bf16 %v83, %v83
    %v92 = vpack.c.bf16 %v84, %v84
    %v93 = vpack.c.bf16 %v85, %v85
    %v94 = vpack.c.bf16 %v86, %v86
    %v95 = vld [vmem:[#allocation4] sm:$0xf]
    %v96 = vld [vmem:[#allocation4 + $0x4] sm:$0xf]
    %v97 = vld [vmem:[#allocation4 + $0x8] sm:$0xf]
    %v98 = vld [vmem:[#allocation4 + $0xc] sm:$0xf]
    %v99 = vld [vmem:[#allocation4 + $0x10] sm:$0xf]
    %v100 = vld [vmem:[#allocation4 + $0x14] sm:$0xf]
    %v101 = vld [vmem:[#allocation4 + $0x18] sm:$0xf]
    %v102 = vld [vmem:[#allocation4 + $0x1c] sm:$0xf]
    %v103 = vld [vmem:[#allocation4 + $0x20] sm:$0xf]
    %v104 = vld [vmem:[#allocation4 + $0x24] sm:$0xf]
    %v105 = vld [vmem:[#allocation4 + $0x28] sm:$0xf]
    %v106 = vld [vmem:[#allocation4 + $0x2c] sm:$0xf]
    %v107 = vld [vmem:[#allocation4 + $0x30] sm:$0xf]
    %v108 = vld [vmem:[#allocation4 + $0x34] sm:$0xf]
    %v109 = vld [vmem:[#allocation4 + $0x38] sm:$0xf]
    %v110 = vld [vmem:[#allocation4 + $0x3c] sm:$0xf]
    %v111 = vld [vmem:[#allocation4 + $0x40] sm:$0xf]
    %v112 = vld [vmem:[#allocation4 + $0x44] sm:$0xf]
    %v113 = vld [vmem:[#allocation4 + $0x48] sm:$0xf]
    %v114 = vld [vmem:[#allocation4 + $0x4c] sm:$0xf]
    %v115 = vld [vmem:[#allocation4 + $0x50] sm:$0xf]
    %v116 = vld [vmem:[#allocation4 + $0x54] sm:$0xf]
    %v117 = vld [vmem:[#allocation4 + $0x58] sm:$0xf]
    %v118 = vld [vmem:[#allocation4 + $0x5c] sm:$0xf]
    %v119 = vld [vmem:[#allocation4 + $0x60] sm:$0xf]
    %v120 = vld [vmem:[#allocation4 + $0x64] sm:$0xf]
    %v121 = vld [vmem:[#allocation4 + $0x68] sm:$0xf]
    %v122 = vld [vmem:[#allocation4 + $0x6c] sm:$0xf]
    %v123 = vld [vmem:[#allocation4 + $0x70] sm:$0xf]
    %v124 = vld [vmem:[#allocation4 + $0x74] sm:$0xf]
    %v125 = vld [vmem:[#allocation4 + $0x78] sm:$0xf]
    %v126 = vld [vmem:[#allocation4 + $0x7c] sm:$0xf]
    %v127 = vld [vmem:[#allocation4 + $0x80] sm:$0xf]
    %v128 = vld [vmem:[#allocation4 + $0x84] sm:$0xf]
    %v129 = vld [vmem:[#allocation4 + $0x88] sm:$0xf]
    %v130 = vld [vmem:[#allocation4 + $0x8c] sm:$0xf]
    %v131 = vld [vmem:[#allocation4 + $0x90] sm:$0xf]
    %v132 = vld [vmem:[#allocation4 + $0x94] sm:$0xf]
    %v133 = vld [vmem:[#allocation4 + $0x98] sm:$0xf]
    %v134 = vld [vmem:[#allocation4 + $0x9c] sm:$0xf]
    %v135 = vld [vmem:[#allocation4 + $0xa0] sm:$0xf]
    %v136 = vld [vmem:[#allocation4 + $0xa4] sm:$0xf]
    %v137 = vld [vmem:[#allocation4 + $0xa8] sm:$0xf]
    %v138 = vld [vmem:[#allocation4 + $0xac] sm:$0xf]
    %v139 = vld [vmem:[#allocation4 + $0xb0] sm:$0xf]
    %v140 = vld [vmem:[#allocation4 + $0xb4] sm:$0xf]
    %v141 = vld [vmem:[#allocation4 + $0xb8] sm:$0xf]
    %v142 = vld [vmem:[#allocation4 + $0xbc] sm:$0xf]
    %v143 = vld [vmem:[#allocation4 + $0xc0] sm:$0xf]
    %v144 = vld [vmem:[#allocation4 + $0xc4] sm:$0xf]
    %v145 = vld [vmem:[%s2] sm:$0x1]
    %v147 = vlaneseq
    %v148 = vshrl.u32 %v147, 7
    %v149 = vsub.s32 0, %v148
    %v150 = vrot.slane %v145, %v149
    %v202 = vunpack.c.l.b16 %v95
    %v203 = vunpack.c.l.b16 %v96
    %v204 = vunpack.c.l.b16 %v97
    %v205 = vunpack.c.l.b16 %v98
    %v206 = vunpack.c.l.b16 %v99
    %v207 = vunpack.c.l.b16 %v100
    %v208 = vunpack.c.l.b16 %v101
    %v209 = vunpack.c.l.b16 %v102
    %v210 = vunpack.c.l.b16 %v103
    %v211 = vunpack.c.l.b16 %v104
    %v212 = vunpack.c.l.b16 %v105
    %v213 = vunpack.c.l.b16 %v106
    %v214 = vunpack.c.l.b16 %v107
    %v215 = vunpack.c.l.b16 %v108
    %v216 = vunpack.c.l.b16 %v109
    %v217 = vunpack.c.l.b16 %v110
    %v218 = vunpack.c.l.b16 %v111
    %v219 = vunpack.c.l.b16 %v112
    %v220 = vunpack.c.l.b16 %v113
    %v221 = vunpack.c.l.b16 %v114
    %v222 = vunpack.c.l.b16 %v115
    %v223 = vunpack.c.l.b16 %v116
    %v224 = vunpack.c.l.b16 %v117
    %v225 = vunpack.c.l.b16 %v118
    %v226 = vunpack.c.l.b16 %v119
    %v227 = vunpack.c.l.b16 %v120
    %v228 = vunpack.c.l.b16 %v121
    %v229 = vunpack.c.l.b16 %v122
    %v230 = vunpack.c.l.b16 %v123
    %v231 = vunpack.c.l.b16 %v124
    %v232 = vunpack.c.l.b16 %v125
    %v233 = vunpack.c.l.b16 %v126
    %v234 = vunpack.c.l.b16 %v127
    %v235 = vunpack.c.l.b16 %v128
    %v236 = vunpack.c.l.b16 %v129
    %v237 = vunpack.c.l.b16 %v130
    %v238 = vunpack.c.l.b16 %v131
    %v239 = vunpack.c.l.b16 %v132
    %v240 = vunpack.c.l.b16 %v133
    %v241 = vunpack.c.l.b16 %v134
    %v242 = vunpack.c.l.b16 %v135
    %v243 = vunpack.c.l.b16 %v136
    %v244 = vunpack.c.l.b16 %v137
    %v245 = vunpack.c.l.b16 %v138
    %v246 = vunpack.c.l.b16 %v139
    %v247 = vunpack.c.l.b16 %v140
    %v248 = vunpack.c.l.b16 %v141
    %v249 = vunpack.c.l.b16 %v142
    %v250 = vunpack.c.l.b16 %v143
    %v251 = vunpack.c.l.b16 %v144
    %v252 = vpack.c.b16 %v203, %v202
    %v253 = vpack.c.b16 %v205, %v204
    %v254 = vpack.c.b16 %v207, %v206
    %v255 = vpack.c.b16 %v209, %v208
    %v256 = vpack.c.b16 %v211, %v210
    %v257 = vpack.c.b16 %v213, %v212
    %v258 = vpack.c.b16 %v215, %v214
    %v259 = vpack.c.b16 %v217, %v216
    %v260 = vpack.c.b16 %v219, %v218
    %v261 = vpack.c.b16 %v221, %v220
    %v262 = vpack.c.b16 %v223, %v222
    %v263 = vpack.c.b16 %v225, %v224
    %v264 = vpack.c.b16 %v227, %v226
    %v265 = vpack.c.b16 %v229, %v228
    %v266 = vpack.c.b16 %v231, %v230
    %v267 = vpack.c.b16 %v233, %v232
    %v268 = vpack.c.b16 %v235, %v234
    %v269 = vpack.c.b16 %v237, %v236
    %v270 = vpack.c.b16 %v239, %v238
    %v271 = vpack.c.b16 %v241, %v240
    %v272 = vpack.c.b16 %v243, %v242
    %v273 = vpack.c.b16 %v245, %v244
    %v274 = vpack.c.b16 %v247, %v246
    %v275 = vpack.c.b16 %v249, %v248
    %v276 = vpack.c.b16 %v251, %v250
    %vm302 = vcmask 130048
    %v304 = vsel %vm302, %v94, 0
    %306 = vmatprep.subr.bf16.mxu0 0
    %307 = vmatpush1.bf16.msra.mxu0 %v252
    %308 = vmatprep.subr.bf16.mxu0 0
    %309 = vmatpush1.bf16.msra.mxu0 %v253
    %310 = vmatprep.subr.bf16.mxu0 0
    %311 = vmatpush1.bf16.msra.mxu0 %v254
    %312 = vmatprep.subr.bf16.mxu0 0
    %313 = vmatpush1.bf16.msra.mxu0 %v255
    %314 = vmatprep.subr.bf16.mxu0 0
    %315 = vmatpush1.bf16.msra.mxu0 %v256
    %316 = vmatprep.subr.bf16.mxu0 0
    %317 = vmatpush1.bf16.msra.mxu0 %v257
    %318 = vmatprep.subr.bf16.mxu0 0
    %319 = vmatpush1.bf16.msra.mxu0 %v258
    %320 = vmatprep.subr.bf16.mxu0 0
    %321 = vmatpush1.bf16.msra.mxu0 %v259
    %322 = vmatprep.subr.bf16.mxu0 0
    %323 = vmatpush1.bf16.msra.mxu0 %v260
    %324 = vmatprep.subr.bf16.mxu0 0
    %325 = vmatpush1.bf16.msra.mxu0 %v261
    %326 = vmatprep.subr.bf16.mxu0 0
    %327 = vmatpush1.bf16.msra.mxu0 %v262
    %328 = vmatprep.subr.bf16.mxu0 0
    %329 = vmatpush1.bf16.msra.mxu0 %v263
    %330 = vmatprep.subr.bf16.mxu0 0
    %331 = vmatpush1.bf16.msra.mxu0 %v264
    %332 = vmatprep.subr.bf16.mxu0 0
    %333 = vmatpush1.bf16.msra.mxu0 %v265
    %334 = vmatprep.subr.bf16.mxu0 0
    %335 = vmatpush1.bf16.msra.mxu0 %v266
    %336 = vmatprep.subr.bf16.mxu0 0
    %337 = vmatpush1.bf16.msra.mxu0 %v267
    %338 = vmatprep.mubr.bf16.mxu0 %v92
    %339 = vmatmul.mubr.bf16.gmra.mrb[0].mxu0 %v91
    %v340 = vpop.f32.mrb[0].mxu0
    %v341 = vadd.f32 %v150, %v340
    %v342 = vpop.f32.mrb[0].mxu0
    %v343 = vpop.f32.mrb[0].mxu0
    %v344 = vpop.f32.mrb[0].mxu0
    %345 = vdwg.mxu0
    %346 = vmatprep.subr.bf16.mxu0 0
    %347 = vmatpush1.bf16.msra.mxu0 %v268
    %348 = vmatprep.subr.bf16.mxu0 0
    %349 = vmatpush1.bf16.msra.mxu0 %v269
    %350 = vmatprep.subr.bf16.mxu0 0
    %351 = vmatpush1.bf16.msra.mxu0 %v270
    %352 = vmatprep.subr.bf16.mxu0 0
    %353 = vmatpush1.bf16.msra.mxu0 %v271
    %354 = vmatprep.subr.bf16.mxu0 0
    %355 = vmatpush1.bf16.msra.mxu0 %v272
    %356 = vmatprep.subr.bf16.mxu0 0
    %357 = vmatpush1.bf16.msra.mxu0 %v273
    %358 = vmatprep.subr.bf16.mxu0 0
    %359 = vmatpush1.bf16.msra.mxu0 %v274
    %360 = vmatprep.subr.bf16.mxu0 0
    %361 = vmatpush1.bf16.msra.mxu0 %v275
    %362 = vmatprep.subr.bf16.mxu0 0
    %363 = vmatpush1.bf16.msra.mxu0 %v276
    %364 = vmatprep.subr.bf16.mxu0 0
    %365 = vmatpush1.bf16.msra.mxu0 0
    %366 = vmatprep.subr.bf16.mxu0 0
    %367 = vmatpush1.bf16.msra.mxu0 0
    %368 = vmatprep.subr.bf16.mxu0 0
    %369 = vmatpush1.bf16.msra.mxu0 0
    %370 = vmatprep.subr.bf16.mxu0 0
    %371 = vmatpush1.bf16.msra.mxu0 0
    %372 = vmatprep.subr.bf16.mxu0 0
    %373 = vmatpush1.bf16.msra.mxu0 0
    %374 = vmatprep.subr.bf16.mxu0 0
    %375 = vmatpush1.bf16.msra.mxu0 0
    %376 = vmatprep.subr.bf16.mxu0 0
    %377 = vmatpush1.bf16.msra.mxu0 0
    %378 = vmatprep.mubr.bf16.mxu0 %v304
    %379 = vmatmul.mubr.bf16.gmra.mrb[0].mxu0 %v93
    %v380 = vpop.f32.mrb[0].mxu0
    %v381 = vadd.f32 %v341, %v380
    %v382 = vpop.f32.mrb[0].mxu0
    %v383 = vpop.f32.mrb[0].mxu0
    %v384 = vpop.f32.mrb[0].mxu0
    %385 = vdwg.mxu0
    %v386 = vpack.c.bf16 %v381, %v381
    %v389 = vunpack.c.l.s4 1966171168
    %v390 = vunpack.c.0.s8 %v389
    %v391 = vlaneseq
    %v392 = vshrl.u32 %v391, 7
    %v393 = vsub.s32 %v390, %v392
    %v394 = vrot.slane %v386, %v393
    %v395 = vcombine.high %v394, %v394
    %v397 = vunpack.c.l.s4 1966171168
    %v398 = vunpack.c.0.s8 %v397
    %v399 = vlaneseq
    %v400 = vshrl.u32 %v399, 7
    %v401 = vsub.s32 %v398, %v400
    %v402 = vrot.slane %v394, %v401
    %v404 = vunpack.c.l.s4 1966171168
    %v405 = vunpack.c.0.s8 %v404
    %v406 = vlaneseq
    %v407 = vshrl.u32 %v406, 7
    %v408 = vsub.s32 %v405, %v407
    %v409 = vrot.slane %v395, %v408
    %v410 = vcombine.high %v402, %v402
    %v411 = vcombine.high %v409, %v409
    %416 = vst [vmem:[#allocation6] sm:$0x1] %v402
    %417 = vst [vmem:[#allocation6 + $0x1] sm:$0x1] %v409
    %418 = vst [vmem:[#allocation6 + $0x2] sm:$0x1] %v410
    %419 = vst [vmem:[#allocation6 + $0x3] sm:$0x1] %v411
    // Predicated region
    $region22: #{torch_cnn_forward.1} parent=1 // pred_check
      _
    $region23: #{torch_cnn_forward.1} parent=1 // pred_check_branch
      %421 = sbr.rel (0) target = $region25
    $region24: #{torch_cnn_forward.1} parent=1 // pred_region
      // Predicated region
      $region26: #{torch_cnn_forward.1} parent=24 // pred_check
        _
      $region27: #{torch_cnn_forward.1} parent=24 // pred_check_branch
        %423 = sbr.rel (0) target = $region29
      $region28: #{torch_cnn_forward.1} parent=24 // pred_region
        // Predicated region
        $region30: #{torch_cnn_forward.1} parent=28 // pred_check
          _
        $region31: #{torch_cnn_forward.1} parent=28 // pred_check_branch
          %425 = sbr.rel target = $region33
        $region32: #{torch_cnn_forward.1} parent=28 // pred_region
          // Predicated region
          $region45: #{torch_cnn_forward.1} parent=32 // pred_check
            _
          $region46: #{torch_cnn_forward.1} parent=32 // pred_check_branch
            %440 = sbr.rel (0) target = $region48
          $region47: #{torch_cnn_forward.1} parent=32 // pred_region
            loop: start=0, step=1, limit=1
            $region49: #{torch_cnn_forward.1} parent=47 // loop_pre_header
              _
            $region50: #{torch_cnn_forward.1} parent=47 // loop_header
              %s443 = sphi 0, %s447
              %p444 = scmp.ge.s32.totalorder %s443, 1
              %s448 = sphi [#allocation6], [#allocation6]
              %s449 = sphi %s3, %s3
            $region51: #{torch_cnn_forward.1} parent=47 // loop_header_branch
              %446 = sbr.rel (%p444) target = $region55
            $region52: #{torch_cnn_forward.1} parent=47 // loop_body
              %v450 = vld [vmem:[%s448] sm:$0x1]
              %451 = vst [vmem:[%s449] sm:$0x1] %v450
            $region53: #{torch_cnn_forward.1} parent=47 // loop_footer
              %s447 = sadd.s32 1, %s443
            $region54: #{torch_cnn_forward.1} parent=47 // loop_footer_branch
              %442 = sbr.rel target = $region50
            $region55: #{torch_cnn_forward.1} parent=47 // loop_exit
              _
          $region48: #{torch_cnn_forward.1} parent=32 // pred_fallthru
            _
        $region33: #{torch_cnn_forward.1} parent=28 // pred_fallthru
          _
        // Predicated region
        $region34: #{torch_cnn_forward.1} parent=28 // pred_check
          _
        $region35: #{torch_cnn_forward.1} parent=28 // pred_check_branch
          %427 = sbr.rel (0) target = $region37
        $region36: #{torch_cnn_forward.1} parent=28 // pred_region
          loop: start=0, step=1, limit=1
          $region38: #{torch_cnn_forward.1} parent=36 // loop_pre_header
            _
          $region39: #{torch_cnn_forward.1} parent=36 // loop_header
            %s430 = sphi 0, %s434
            %p431 = scmp.ge.s32.totalorder %s430, 1
            %s435 = sphi [#allocation6], [#allocation6]
            %s436 = sphi %s3, %s3
          $region40: #{torch_cnn_forward.1} parent=36 // loop_header_branch
            %433 = sbr.rel (%p431) target = $region44
          $region41: #{torch_cnn_forward.1} parent=36 // loop_body
            %v437 = vld [vmem:[%s435] sm:$0x1]
            %438 = vst [vmem:[%s436] sm:$0x1] %v437
          $region42: #{torch_cnn_forward.1} parent=36 // loop_footer
            %s434 = sadd.s32 1, %s430
          $region43: #{torch_cnn_forward.1} parent=36 // loop_footer_branch
            %429 = sbr.rel target = $region39
          $region44: #{torch_cnn_forward.1} parent=36 // loop_exit
            _
        $region37: #{torch_cnn_forward.1} parent=28 // pred_fallthru
          _
      $region29: #{torch_cnn_forward.1} parent=24 // pred_fallthru
        _
      %452 = vnop
    $region25: #{torch_cnn_forward.1} parent=1 // pred_fallthru
      _
    // Predicated region
    $region56: #{torch_cnn_forward.1} parent=1 // pred_check
      _
    $region57: #{torch_cnn_forward.1} parent=1 // pred_check_branch
      %454 = sbr.rel (0) target = $region59
    $region58: #{torch_cnn_forward.1} parent=1 // pred_region
      _
    $region59: #{torch_cnn_forward.1} parent=1 // pred_fallthru
      _
    %455 = vsyncpa [#allocation3], 1
    %456 = vsyncpa [#allocation5], 1

</llo_original>
